<compile_context>
chip_gen: v7x
topology: tpu7x:2x2x1
jax: 0.10.0
libtpu: 0.0.40
codegen_flags: <defaults>
</compile_context>

<pallas_src>
import functools

import jax
import jax.numpy as jnp
from jax.experimental import pallas as pl
from jax.experimental.pallas import tpu as pltpu


_VMEM_LIMIT_BYTES = 48 * 1024 * 1024      # explicit scoped-VMEM budget (< 64 MiB v7x physical)
_H_RESIDENT_BUDGET = 24 * 1024 * 1024     # keep H fully in VMEM when 2x its size fits here


def _round_up(x, m):
    return ((x + m - 1) // m) * m


def _pad2d(a, rows, cols):
    return jnp.pad(a, ((0, rows - a.shape[0]), (0, cols - a.shape[1])))


def _choose_tiles(n_p):
    """Pick (tm, tk) dividing n_p (a multiple of 128).

    Large tiles amortize per-grid-step overhead; tm is capped so that at least
    4 row tiles exist when possible (row axis is the 'parallel' axis that
    shards across v7x's two TensorCores)."""
    tm = 128
    for cand in (512, 256):
        if n_p % cand == 0 and n_p // cand >= 4:
            tm = cand
            break
    m = n_p // 128
    tk = 128
    for d in range(min(m, 16), 0, -1):        # tk <= 2048
        if m % d == 0:
            tk = d * 128
            break
    return tm, tk


# ---------------------------------------------------------------------------
# Pre-pass: fused root path (+ optional projection), row-tiled.
#   root = X @ Wr + b   (f32)      h = X @ Wl   (bf16, only when project_first)
# ---------------------------------------------------------------------------
def _pre_proj_kernel(x_ref, wl_ref, wr_ref, b_ref, h_ref, root_ref):
    x = x_ref[...]
    h_ref[...] = jnp.dot(
        x, wl_ref[...], preferred_element_type=jnp.float32).astype(h_ref.dtype)
    root_ref[...] = (jnp.dot(x, wr_ref[...], preferred_element_type=jnp.float32)
                     + b_ref[...]).astype(root_ref.dtype)


def _pre_root_kernel(x_ref, wr_ref, b_ref, root_ref):
    root_ref[...] = (jnp.dot(x_ref[...], wr_ref[...],
                             preferred_element_type=jnp.float32)
                     + b_ref[...]).astype(root_ref.dtype)


def _pre_pass(x_bf16, wl_bf16, wr_bf16, bias_f32, *, tm, project_first):
    n_p, c_in = x_bf16.shape
    c_out = wr_bf16.shape[1]
    grid = (n_p // tm,)

    x_spec = pl.BlockSpec((tm, c_in), lambda i: (i, 0))
    w_spec = pl.BlockSpec((c_in, c_out), lambda i: (0, 0))
    b_spec = pl.BlockSpec((1, c_out), lambda i: (0, 0))
    o_spec = pl.BlockSpec((tm, c_out), lambda i: (i, 0))
    cparams = pltpu.CompilerParams(dimension_semantics=("parallel",),
                                   vmem_limit_bytes=_VMEM_LIMIT_BYTES)

    if project_first:
        h, root = pl.pallas_call(
            _pre_proj_kernel,
            out_shape=(jax.ShapeDtypeStruct((n_p, c_out), jnp.bfloat16),
                       jax.ShapeDtypeStruct((n_p, c_out), jnp.float32)),
            grid_spec=pltpu.PrefetchScalarGridSpec(
                num_scalar_prefetch=0, grid=grid,
                in_specs=[x_spec, w_spec, w_spec, b_spec],
                out_specs=(o_spec, o_spec)),
            compiler_params=cparams,
        )(x_bf16, wl_bf16, wr_bf16, bias_f32)
        return h, root

    root = pl.pallas_call(
        _pre_root_kernel,
        out_shape=jax.ShapeDtypeStruct((n_p, c_out), jnp.float32),
        grid_spec=pltpu.PrefetchScalarGridSpec(
            num_scalar_prefetch=0, grid=grid,
            in_specs=[x_spec, w_spec, b_spec],
            out_specs=o_spec),
        compiler_params=cparams,
    )(x_bf16, wr_bf16, bias_f32)
    return None, root


# ---------------------------------------------------------------------------
# Aggregation: out = relu?( (1/deg) * (A01 @ H) (@ Wl) + root )
# Grid = (row tiles, contraction tiles); f32 VMEM accumulator, pl.when init/finalize.
# ---------------------------------------------------------------------------
def _sage_agg_kernel(*refs, apply_relu, project_first, h_resident, tk):
    if project_first:
        a_ref, h_ref, root_ref, inv_ref, o_ref, acc_ref = refs
        wl_ref = None
    else:
        a_ref, h_ref, root_ref, inv_ref, wl_ref, o_ref, acc_ref = refs

    k = pl.program_id(1)

    @pl.when(k == 0)
    def _():
        acc_ref[...] = jnp.zeros_like(acc_ref)

    # A is exact {0,1} int8 (half the HBM bytes of bf16); cast on the VPU — the
    # kernel is HBM-bound — and feed bf16 to the MXU with f32 accumulation.
    a = a_ref[...].astype(jnp.float32).astype(jnp.bfloat16)
    if h_resident:
        start = pl.multiple_of(k * tk, tk)
        h = h_ref[pl.ds(start, tk), :]
    else:
        h = h_ref[...]
    acc_ref[...] += jnp.dot(a, h, preferred_element_type=jnp.float32)

    @pl.when(k == pl.num_programs(1) - 1)
    def _():
        agg = acc_ref[...] * inv_ref[...]          # exact f32 per-row 1/deg scale
        if not project_first:
            agg = jnp.dot(agg.astype(jnp.bfloat16), wl_ref[...],
                          preferred_element_type=jnp.float32)
        out = agg + root_ref[...]
        if apply_relu:
            out = jnp.maximum(out, 0.0)
        o_ref[...] = out.astype(o_ref.dtype)


def _sage_aggregate(adj_i8, h, root, inv_deg, wl_bf16, *, apply_relu, out_dtype,
                    tm, tk, h_resident):
    n_p = adj_i8.shape[0]
    c_h = h.shape[1]
    c_out = root.shape[1]
    project_first = wl_bf16 is None
    grid = (n_p // tm, n_p // tk)

    if h_resident:
        # Full-array block, constant index_map: H loaded once and reused across
        # all row tiles instead of being re-streamed (n_p/tm) times.
        h_spec = pl.BlockSpec((n_p, c_h), lambda i, k: (0, 0))
    else:
        h_spec = pl.BlockSpec((tk, c_h), lambda i, k: (k, 0))

    in_specs = [
        pl.BlockSpec((tm, tk), lambda i, k: (i, k)),        # A tile (int8 0/1)
        h_spec,                                             # H
        pl.BlockSpec((tm, c_out), lambda i, k: (i, 0)),     # root (f32)
        pl.BlockSpec((tm, 1), lambda i, k: (i, 0)),         # 1/deg (f32)
    ]
    operands = [adj_i8, h, root, inv_deg]
    if not project_first:
        in_specs.append(pl.BlockSpec((c_h, c_out), lambda i, k: (0, 0)))  # Wl
        operands.append(wl_bf16)

    kernel = functools.partial(_sage_agg_kernel, apply_relu=apply_relu,
                               project_first=project_first,
                               h_resident=h_resident, tk=tk)

    flops = 2 * n_p * n_p * c_h + (0 if project_first else 2 * n_p * c_h * c_out)
    bytes_accessed = int(
        n_p * n_p                                                   # A (int8)
        + (n_p if h_resident else (n_p // tm) * n_p) * c_h * 2      # H (bf16)
        + n_p * c_out * 4 + n_p * 4                                 # root, 1/deg
        + n_p * c_out * jnp.dtype(out_dtype).itemsize)              # out

    return pl.pallas_call(
        kernel,
        out_shape=jax.ShapeDtypeStruct((n_p, c_out), out_dtype),
        grid_spec=pltpu.PrefetchScalarGridSpec(
            num_scalar_prefetch=0, grid=grid,
            in_specs=in_specs,
            out_specs=pl.BlockSpec((tm, c_out), lambda i, k: (i, 0)),
            scratch_shapes=[pltpu.VMEM((tm, c_h), jnp.float32)]),
        compiler_params=pltpu.CompilerParams(
            dimension_semantics=("parallel", "arbitrary"),
            vmem_limit_bytes=_VMEM_LIMIT_BYTES),
        cost_estimate=pl.CostEstimate(flops=flops, transcendentals=0,
                                      bytes_accessed=bytes_accessed),
    )(*operands)


# ---------------------------------------------------------------------------
# Model
# ---------------------------------------------------------------------------
def init_sage_params(key, in_channels, hidden_channels, out_channels, num_layers):
    """Glorot-uniform-ish init matching SAGEConv parameter shapes (stored [Cin, Cout])."""
    dims = [in_channels] + [hidden_channels] * (num_layers - 1) + [out_channels]
    params = []
    for layer in range(num_layers):
        c_in, c_out = dims[layer], dims[layer + 1]
        key, k1, k2 = jax.random.split(key, 3)
        scale = (6.0 / (c_in + c_out)) ** 0.5
        w_l = jax.random.uniform(k1, (c_in, c_out), jnp.float32, -scale, scale)
        w_r = jax.random.uniform(k2, (c_in, c_out), jnp.float32, -scale, scale)
        b = jnp.zeros((1, c_out), jnp.float32)
        params.append((w_l, w_r, b))
    return params


def sage_forward(x, adj, params):
    """SAGE.forward (eval mode).  `adj` is a dense {0,1} adjacency,
    adj[i, j] = 1 iff j in N(i); aggregation is the mean over neighbours."""
    n, c_in = x.shape
    out_channels = params[-1][0].shape[1]

    n_p = _round_up(max(n, 1), 128)             # pad only to 128, never to tk
    tm, tk = _choose_tiles(n_p)

    # Exact 0/1 adjacency in int8; 1/deg applied as f32 per-row scale in-kernel.
    adj_i8 = _pad2d(adj, n_p, n_p).astype(jnp.int8)
    deg = jnp.sum(adj.astype(jnp.float32), axis=1, keepdims=True)
    inv_deg = jnp.where(deg > 0, 1.0 / jnp.maximum(deg, 1.0), 0.0)
    inv_deg = jnp.pad(inv_deg, ((0, n_p - n), (0, 0))).astype(jnp.float32)

    h = _pad2d(x, n_p, _round_up(c_in, 128)).astype(jnp.bfloat16)

    num_layers = len(params)
    for li, (w_l, w_r, b) in enumerate(params):
        c_in_p = h.shape[1]
        c_out_p = _round_up(w_l.shape[1], 128)
        wl_p = _pad2d(w_l, c_in_p, c_out_p).astype(jnp.bfloat16)
        wr_p = _pad2d(w_r, c_in_p, c_out_p).astype(jnp.bfloat16)
        b_p = _pad2d(b, 1, c_out_p).astype(jnp.float32)
        last = li == num_layers - 1

        # Matmul reassociation: project before aggregating when it shrinks H.
        project_first = c_out_p <= c_in_p
        h_proj, root = _pre_pass(h, wl_p, wr_p, b_p, tm=tm,
                                 project_first=project_first)
        if project_first:
            h_agg, wl_arg, c_h = h_proj, None, c_out_p
        else:
            h_agg, wl_arg, c_h = h, wl_p, c_in_p

        # Keep H resident in VMEM when a (double-buffered) copy fits the budget.
        h_resident = 2 * n_p * c_h * 2 <= _H_RESIDENT_BUDGET

        # TODO(synk): F.dropout is identity here (eval mode); training-mode dropout
        # would draw a mask with pltpu.prng_random_bits inside the kernel.
        h = _sage_aggregate(adj_i8, h_agg, root, inv_deg, wl_arg,
                            apply_relu=not last,
                            out_dtype=jnp.float32 if last else jnp.bfloat16,
                            tm=tm, tk=tk, h_resident=h_resident)
    return h[:n, :out_channels]


def _reference_forward(x, adj, params):
    """Pure-JAX f32 reference of the same forward pass."""
    deg = jnp.sum(adj, axis=1, keepdims=True)
    adj_norm = adj / jnp.maximum(deg, 1.0)
    h = x
    for li, (w_l, w_r, b) in enumerate(params):
        out = adj_norm @ h @ w_l + h @ w_r + b
        h = jnp.maximum(out, 0.0) if li < len(params) - 1 else out
    return h


def _run_case(key, n, in_ch, hidden, out_ch, num_layers):
    key, kx, ka, kp = jax.random.split(key, 4)
    x = jax.random.normal(kx, (n, in_ch), jnp.float32)
    adj = (jax.random.uniform(ka, (n, n)) < 0.2).astype(jnp.float32)  # {0,1}
    params = init_sage_params(kp, in_ch, hidden, out_ch, num_layers)

    out = jax.block_until_ready(sage_forward(x, adj, params))
    assert out.shape == (n, out_ch), out.shape

    ref = _reference_forward(x, adj, params)
    err = float(jnp.max(jnp.abs(out - ref)))
    tol = 5e-2 * (1.0 + float(jnp.max(jnp.abs(ref))))   # bf16 MXU inputs, f32 accum
    assert err < tol, (err, tol)


if __name__ == "__main__":
    key = jax.random.PRNGKey(0)
    key, k1, k2 = jax.random.split(key, 3)

    # Case 1: matches the nodeproppred/proteins-style config (project-first path).
    _run_case(k1, n=32, in_ch=16, hidden=32, out_ch=8, num_layers=3)
    # Case 2: exercises the aggregate-first path (hidden > in_channels).
    _run_case(k2, n=48, in_ch=8, hidden=256, out_ch=4, num_layers=2)

    print("KERNEL_OK")
</pallas_src>

<mosaic_0001>
module attributes {stable_mosaic.version = 11 : i64} {
  func.func @_pre_proj_kernel(%arg0: i32, %arg1: memref<128x128xbf16, #tpu.memory_space<vmem>>, %arg2: memref<128x128xbf16, #tpu.memory_space<vmem>>, %arg3: memref<128x128xbf16, #tpu.memory_space<vmem>>, %arg4: memref<1x128xf32, #tpu.memory_space<vmem>>, %arg5: memref<128x128xbf16, #tpu.memory_space<vmem>>, %arg6: memref<128x128xf32, #tpu.memory_space<vmem>>) attributes {dimension_semantics = [#tpu.dimension_semantics<parallel>], iteration_bounds = array<i64: 1>, scalar_prefetch = 0 : i64, scratch_operands = 0 : i64, tpu.core_type = #tpu.core_type<tc>, window_params = [{transform_indices = @transform_0, window_bounds = array<i64: 128, 128>}, {pipeline_mode = #tpu.pipeline_mode<synchronous>, transform_indices = @transform_1, window_bounds = array<i64: 128, 128>}, {pipeline_mode = #tpu.pipeline_mode<synchronous>, transform_indices = @transform_2, window_bounds = array<i64: 128, 128>}, {pipeline_mode = #tpu.pipeline_mode<synchronous>, transform_indices = @transform_3, window_bounds = array<i64: 1, 128>}, {transform_indices = @transform_4, window_bounds = array<i64: 128, 128>}, {transform_indices = @transform_5, window_bounds = array<i64: 128, 128>}]} {
    %c0 = arith.constant 0 : index
    %c0_0 = arith.constant 0 : index
    %0 = vector.load %arg1[%c0, %c0_0] : memref<128x128xbf16, #tpu.memory_space<vmem>>, vector<128x128xbf16>
    %c0_1 = arith.constant 0 : index
    %c0_2 = arith.constant 0 : index
    %1 = vector.load %arg2[%c0_1, %c0_2] : memref<128x128xbf16, #tpu.memory_space<vmem>>, vector<128x128xbf16>
    %cst = arith.constant dense<0.000000e+00> : vector<128x128xf32>
    %2 = tpu.matmul %0, %1, %cst {dimension_numbers = #tpu.dot_dimension_numbers<[1], [0], [0], [1], [0, 0, 1, 1], [], []>} : vector<128x128xbf16>, vector<128x128xbf16>, vector<128x128xf32> -> vector<128x128xf32>
    %3 = arith.truncf %2 : vector<128x128xf32> to vector<128x128xbf16>
    %c0_3 = arith.constant 0 : index
    %c0_4 = arith.constant 0 : index
    %4 = vector.load %arg5[%c0_3, %c0_4] : memref<128x128xbf16, #tpu.memory_space<vmem>>, vector<128x128xbf16>
    tpu.vector_store %arg5[%c0_3, %c0_4], %3 {strides = array<i32>} : memref<128x128xbf16, #tpu.memory_space<vmem>>, vector<128x128xbf16>,
    %c0_5 = arith.constant 0 : index
    %c0_6 = arith.constant 0 : index
    %5 = vector.load %arg3[%c0_5, %c0_6] : memref<128x128xbf16, #tpu.memory_space<vmem>>, vector<128x128xbf16>
    %cst_7 = arith.constant dense<0.000000e+00> : vector<128x128xf32>
    %6 = tpu.matmul %0, %5, %cst_7 {dimension_numbers = #tpu.dot_dimension_numbers<[1], [0], [0], [1], [0, 0, 1, 1], [], []>} : vector<128x128xbf16>, vector<128x128xbf16>, vector<128x128xf32> -> vector<128x128xf32>
    %c0_8 = arith.constant 0 : index
    %c0_9 = arith.constant 0 : index
    %7 = vector.load %arg4[%c0_8, %c0_9] : memref<1x128xf32, #tpu.memory_space<vmem>>, vector<1x128xf32>
    %8 = vector.broadcast %7 : vector<1x128xf32> to vector<128x128xf32>
    %9 = arith.addf %6, %8 : vector<128x128xf32>
    %c0_10 = arith.constant 0 : index
    %c0_11 = arith.constant 0 : index
    %10 = vector.load %arg6[%c0_10, %c0_11] : memref<128x128xf32, #tpu.memory_space<vmem>>, vector<128x128xf32>
    tpu.vector_store %arg6[%c0_10, %c0_11], %9 {strides = array<i32>} : memref<128x128xf32, #tpu.memory_space<vmem>>, vector<128x128xf32>,
    return
  }
  func.func @transform_0(%arg0: i32) -> (i32, i32) {
    %c0_i32 = arith.constant 0 : i32
    %c0_i32_0 = arith.constant 0 : i32
    return %arg0, %c0_i32 : i32, i32
  }
  func.func @transform_1(%arg0: i32) -> (i32, i32) {
    %c0_i32 = arith.constant 0 : i32
    %c0_i32_0 = arith.constant 0 : i32
    %c0_i32_1 = arith.constant 0 : i32
    return %c0_i32, %c0_i32_0 : i32, i32
  }
  func.func @transform_2(%arg0: i32) -> (i32, i32) {
    %c0_i32 = arith.constant 0 : i32
    %c0_i32_0 = arith.constant 0 : i32
    %c0_i32_1 = arith.constant 0 : i32
    return %c0_i32, %c0_i32_0 : i32, i32
  }
  func.func @transform_3(%arg0: i32) -> (i32, i32) {
    %c0_i32 = arith.constant 0 : i32
    %c0_i32_0 = arith.constant 0 : i32
    %c0_i32_1 = arith.constant 0 : i32
    return %c0_i32, %c0_i32_0 : i32, i32
  }
  func.func @transform_4(%arg0: i32) -> (i32, i32) {
    %c0_i32 = arith.constant 0 : i32
    %c0_i32_0 = arith.constant 0 : i32
    return %arg0, %c0_i32 : i32, i32
  }
  func.func @transform_5(%arg0: i32) -> (i32, i32) {
    %c0_i32 = arith.constant 0 : i32
    %c0_i32_0 = arith.constant 0 : i32
    return %arg0, %c0_i32 : i32, i32
  }
}

</mosaic_0001>

<llo_original>
// kernel: tpu_custom_call.1
$region0: #{tpu_custom_call.1}
  #allocation0 [shape = 'u32[]', space=smem, size = 0x4, offset = 0x4, fixed_abs, tag = 'smem constant byte address 0x4 - core index']
  #allocation1 [shape = 'u32[144,128]{1,0:T(1,128)}', space=vmem, size = 0x12000, scoped, tag = 'internal scratch']
  %s0 = inlined_call_operand.hbm [shape: bf16[128,128], index: 0, kind: input, shape index: {}]
  %s1 = inlined_call_operand.hbm [shape: bf16[128,128], index: 1, kind: input, shape index: {}]
  %s2 = inlined_call_operand.hbm [shape: bf16[128,128], index: 2, kind: input, shape index: {}]
  %s3 = inlined_call_operand.vmem [shape: f32[1,128], index: 3, kind: input, shape index: {}]
  %s4 = inlined_call_operand.hbm [shape: bf16[128,128], index: 4, kind: output, shape index: {0}]
  %s5 = inlined_call_operand.hbm [shape: f32[128,128], index: 5, kind: output, shape index: {1}]
  %6 = xla_tuple %s4, %s5
  %s7 = sld [smem:[#allocation0]]
  $region46: #{tpu_custom_call.1} parent=0
    _
  %s9 = ssub.s32 1, %s7
  %s10 = scalar_select 0, %s9, %s7
  $region1: #{tpu_custom_call.1} parent=0
    #allocation2 [shape = 'u8[32768]{0}', space=vmem, size = 0x8000, scoped, tag = 'input window, operand 0, single buffered']
    #allocation3 [shape = 's32[1]{0}', space=sflag, size = 0x4, scoped, tag = 'scoped memory for tpu_custom_call.1']
    #allocation4 [shape = 's32[1]{0}', space=sflag, size = 0x4, scoped, tag = 'scoped memory for tpu_custom_call.1']
    #allocation5 [shape = 'u8[32768]{0}', space=vmem, size = 0x8000, scoped, tag = 'input window, operand 1, single buffered']
    #allocation6 [shape = 's32[1]{0}', space=sflag, size = 0x4, scoped, tag = 'scoped memory for tpu_custom_call.1']
    #allocation7 [shape = 'u8[32768]{0}', space=vmem, size = 0x8000, scoped, tag = 'input window, operand 2, single buffered']
    #allocation8 [shape = 'u8[32768]{0}', space=vmem, size = 0x8000, scoped, tag = 'output window, operand 0, single buffered']
    #allocation9 [shape = 'u8[65536]{0}', space=vmem, size = 0x10000, scoped, tag = 'output window, operand 1, single buffered']
    #allocation10 [shape = 's32[1]{0}', space=sflag, size = 0x4, scoped, tag = 'scoped memory for tpu_custom_call.1']
    %11 = vsyncpa [#allocation3], 0
    %12 = vsyncpa [#allocation6], 0
    %13 = vsyncpa [#allocation4], 0
    %14 = vsyncpa [#allocation10], 0
    // Predicated region
    $region2: #{tpu_custom_call.1} parent=1 // pred_check
      _
    $region3: #{tpu_custom_call.1} parent=1 // pred_check_branch
      %16 = sbr.rel (0) target = $region5
    $region4: #{tpu_custom_call.1} parent=1 // pred_region
      %s18 = ssub.s32 1024, 1024
      %19 = vsyncadd [#allocation3], %s18
      %s20 = sshll.u32 [#allocation2], 4
      %s21 = int_to_ptr.vmem [resolvable:$true] %s20
      %26 = dma.hbm_to_vmem [thread:$0]  %s0, 1024, %s21, [#allocation3], 64, 64, 4
    $region5: #{tpu_custom_call.1} parent=1 // pred_fallthru
      _
    // Predicated region
    $region6: #{tpu_custom_call.1} parent=1 // pred_check
      _
    $region7: #{tpu_custom_call.1} parent=1 // pred_check_branch
      %28 = sbr.rel (0) target = $region9
    $region8: #{tpu_custom_call.1} parent=1 // pred_region
      %s30 = ssub.s32 1024, 1024
      %31 = vsyncadd [#allocation6], %s30
      %s32 = sshll.u32 [#allocation5], 4
      %s33 = int_to_ptr.vmem [resolvable:$true] %s32
      %38 = dma.hbm_to_vmem [thread:$0]  %s1, 1024, %s33, [#allocation6], 64, 64, 4
    $region9: #{tpu_custom_call.1} parent=1 // pred_fallthru
      _
    // Predicated region
    $region10: #{tpu_custom_call.1} parent=1 // pred_check
      _
    $region11: #{tpu_custom_call.1} parent=1 // pred_check_branch
      %40 = sbr.rel (0) target = $region13
    $region12: #{tpu_custom_call.1} parent=1 // pred_region
      %s42 = ssub.s32 1024, 1024
      %43 = vsyncadd [#allocation6], %s42
      %s44 = sshll.u32 [#allocation7], 4
      %s45 = int_to_ptr.vmem [resolvable:$true] %s44
      %50 = dma.hbm_to_vmem [thread:$0]  %s2, 1024, %s45, [#allocation6], 64, 64, 4
    $region13: #{tpu_custom_call.1} parent=1 // pred_fallthru
      _
    // Predicated region
    $region14: #{tpu_custom_call.1} parent=1 // pred_check
      _
    $region15: #{tpu_custom_call.1} parent=1 // pred_check_branch
      %52 = sbr.rel (0) target = $region17
    $region16: #{tpu_custom_call.1} parent=1 // pred_region
      _
    $region17: #{tpu_custom_call.1} parent=1 // pred_fallthru
      _
    // Predicated region
    $region18: #{tpu_custom_call.1} parent=1 // pred_check
      _
    $region19: #{tpu_custom_call.1} parent=1 // pred_check_branch
      %54 = sbr.rel (0) target = $region21
    $region20: #{tpu_custom_call.1} parent=1 // pred_region
      %55 = dma.done [#allocation3], 1024
    $region21: #{tpu_custom_call.1} parent=1 // pred_fallthru
      _
    // Predicated region
    $region22: #{tpu_custom_call.1} parent=1 // pred_check
      _
    $region23: #{tpu_custom_call.1} parent=1 // pred_check_branch
      %57 = sbr.rel (0) target = $region25
    $region24: #{tpu_custom_call.1} parent=1 // pred_region
      %58 = dma.done [#allocation6], 1024
    $region25: #{tpu_custom_call.1} parent=1 // pred_fallthru
      _
    // Predicated region
    $region26: #{tpu_custom_call.1} parent=1 // pred_check
      _
    $region27: #{tpu_custom_call.1} parent=1 // pred_check_branch
      %60 = sbr.rel (0) target = $region29
    $region28: #{tpu_custom_call.1} parent=1 // pred_region
      %61 = dma.done [#allocation6], 1024
    $region29: #{tpu_custom_call.1} parent=1 // pred_fallthru
      _
    %v63 = vld [vmem:[#allocation2] sm:$0xf]
    %v64 = vld [vmem:[#allocation2 + $0x4] sm:$0xf]
    %v65 = vld [vmem:[#allocation2 + $0x8] sm:$0xf]
    %v66 = vld [vmem:[#allocation2 + $0xc] sm:$0xf]
    %v67 = vld [vmem:[#allocation2 + $0x10] sm:$0xf]
    %v68 = vld [vmem:[#allocation2 + $0x14] sm:$0xf]
    %v69 = vld [vmem:[#allocation2 + $0x18] sm:$0xf]
    %v70 = vld [vmem:[#allocation2 + $0x1c] sm:$0xf]
    %v71 = vld [vmem:[#allocation2 + $0x20] sm:$0xf]
    %v72 = vld [vmem:[#allocation2 + $0x24] sm:$0xf]
    %v73 = vld [vmem:[#allocation2 + $0x28] sm:$0xf]
    %v74 = vld [vmem:[#allocation2 + $0x2c] sm:$0xf]
    %v75 = vld [vmem:[#allocation2 + $0x30] sm:$0xf]
    %v76 = vld [vmem:[#allocation2 + $0x34] sm:$0xf]
    %v77 = vld [vmem:[#allocation2 + $0x38] sm:$0xf]
    %v78 = vld [vmem:[#allocation2 + $0x3c] sm:$0xf]
    %v79 = vld [vmem:[#allocation5] sm:$0xf]
    %v80 = vld [vmem:[#allocation5 + $0x4] sm:$0xf]
    %v81 = vld [vmem:[#allocation5 + $0x8] sm:$0xf]
    %v82 = vld [vmem:[#allocation5 + $0xc] sm:$0xf]
    %v83 = vld [vmem:[#allocation5 + $0x10] sm:$0xf]
    %v84 = vld [vmem:[#allocation5 + $0x14] sm:$0xf]
    %v85 = vld [vmem:[#allocation5 + $0x18] sm:$0xf]
    %v86 = vld [vmem:[#allocation5 + $0x1c] sm:$0xf]
    %v87 = vld [vmem:[#allocation5 + $0x20] sm:$0xf]
    %v88 = vld [vmem:[#allocation5 + $0x24] sm:$0xf]
    %v89 = vld [vmem:[#allocation5 + $0x28] sm:$0xf]
    %v90 = vld [vmem:[#allocation5 + $0x2c] sm:$0xf]
    %v91 = vld [vmem:[#allocation5 + $0x30] sm:$0xf]
    %v92 = vld [vmem:[#allocation5 + $0x34] sm:$0xf]
    %v93 = vld [vmem:[#allocation5 + $0x38] sm:$0xf]
    %v94 = vld [vmem:[#allocation5 + $0x3c] sm:$0xf]
    %v111 = vunpack.c.l.b16 %v63
    %v112 = vunpack.c.l.b16 %v64
    %v113 = vunpack.c.l.b16 %v65
    %v114 = vunpack.c.l.b16 %v66
    %v115 = vunpack.c.l.b16 %v67
    %v116 = vunpack.c.l.b16 %v68
    %v117 = vunpack.c.l.b16 %v69
    %v118 = vunpack.c.l.b16 %v70
    %v119 = vunpack.c.l.b16 %v71
    %v120 = vunpack.c.l.b16 %v72
    %v121 = vunpack.c.l.b16 %v73
    %v122 = vunpack.c.l.b16 %v74
    %v123 = vunpack.c.l.b16 %v75
    %v124 = vunpack.c.l.b16 %v76
    %v125 = vunpack.c.l.b16 %v77
    %v126 = vunpack.c.l.b16 %v78
    %v127 = vpack.c.b16 %v112, %v111
    %v128 = vpack.c.b16 %v114, %v113
    %v129 = vpack.c.b16 %v116, %v115
    %v130 = vpack.c.b16 %v118, %v117
    %v131 = vpack.c.b16 %v120, %v119
    %v132 = vpack.c.b16 %v122, %v121
    %v133 = vpack.c.b16 %v124, %v123
    %v134 = vpack.c.b16 %v126, %v125
    %v159 = vunpack.c.l.b16 %v79
    %v160 = vunpack.c.l.b16 %v80
    %v161 = vunpack.c.l.b16 %v81
    %v162 = vunpack.c.l.b16 %v82
    %v163 = vunpack.c.l.b16 %v83
    %v164 = vunpack.c.l.b16 %v84
    %v165 = vunpack.c.l.b16 %v85
    %v166 = vunpack.c.l.b16 %v86
    %v167 = vunpack.c.l.b16 %v87
    %v168 = vunpack.c.l.b16 %v88
    %v169 = vunpack.c.l.b16 %v89
    %v170 = vunpack.c.l.b16 %v90
    %v171 = vunpack.c.l.b16 %v91
    %v172 = vunpack.c.l.b16 %v92
    %v173 = vunpack.c.l.b16 %v93
    %v174 = vunpack.c.l.b16 %v94
    %v175 = vpack.c.b16 %v160, %v159
    %v176 = vpack.c.b16 %v162, %v161
    %v177 = vpack.c.b16 %v164, %v163
    %v178 = vpack.c.b16 %v166, %v165
    %v179 = vpack.c.b16 %v168, %v167
    %v180 = vpack.c.b16 %v170, %v169
    %v181 = vpack.c.b16 %v172, %v171
    %v182 = vpack.c.b16 %v174, %v173
    %191 = vmatprep.subr.bf16.mxu0 0
    %192 = vmatpush1.bf16.msra.mxu0 %v175
    %193 = vmatprep.subr.bf16.mxu0 0
    %194 = vmatpush1.bf16.msra.mxu0 %v176
    %195 = vmatprep.subr.bf16.mxu0 0
    %196 = vmatpush1.bf16.msra.mxu0 %v177
    %197 = vmatprep.subr.bf16.mxu0 0
    %198 = vmatpush1.bf16.msra.mxu0 %v178
    %199 = vmatprep.subr.bf16.mxu0 0
    %200 = vmatpush1.bf16.msra.mxu0 %v179
    %201 = vmatprep.subr.bf16.mxu0 0
    %202 = vmatpush1.bf16.msra.mxu0 %v180
    %203 = vmatprep.subr.bf16.mxu0 0
    %204 = vmatpush1.bf16.msra.mxu0 %v181
    %205 = vmatprep.subr.bf16.mxu0 0
    %206 = vmatpush1.bf16.msra.mxu0 %v182
    %207 = vmatprep.subr.bf16.mxu0 0
    %208 = vmatpush1.bf16.msra.mxu0 0
    %209 = vmatprep.subr.bf16.mxu0 0
    %210 = vmatpush1.bf16.msra.mxu0 0
    %211 = vmatprep.subr.bf16.mxu0 0
    %212 = vmatpush1.bf16.msra.mxu0 0
    %213 = vmatprep.subr.bf16.mxu0 0
    %214 = vmatpush1.bf16.msra.mxu0 0
    %215 = vmatprep.subr.bf16.mxu0 0
    %216 = vmatpush1.bf16.msra.mxu0 0
    %217 = vmatprep.subr.bf16.mxu0 0
    %218 = vmatpush1.bf16.msra.mxu0 0
    %219 = vmatprep.subr.bf16.mxu0 0
    %220 = vmatpush1.bf16.msra.mxu0 0
    %221 = vmatprep.subr.bf16.mxu0 0
    %222 = vmatpush1.bf16.msra.mxu0 0
    %223 = vmatprep.mubr.bf16.mxu0 0
    %224 = vmatmul.mubr.bf16.gmra.mrb[0].mxu0 %v127
    %v225 = vpop.f32.mrb[0].mxu0
    %v226 = vadd.f32 0.0, %v225
    %v227 = vpop.f32.mrb[0].mxu0
    %v228 = vpop.f32.mrb[0].mxu0
    %v229 = vadd.f32 0.0, %v228
    %v230 = vpop.f32.mrb[0].mxu0
    %231 = vmatprep.mubr.bf16.mxu0 0
    %232 = vmatmul.mubr.bf16.gmra.mrb[0].mxu0 %v128
    %v233 = vpop.f32.mrb[0].mxu0
    %v234 = vadd.f32 0.0, %v233
    %v235 = vpop.f32.mrb[0].mxu0
    %v236 = vpop.f32.mrb[0].mxu0
    %v237 = vadd.f32 0.0, %v236
    %v238 = vpop.f32.mrb[0].mxu0
    %239 = vmatprep.mubr.bf16.mxu0 0
    %240 = vmatmul.mubr.bf16.gmra.mrb[0].mxu0 %v129
    %v241 = vpop.f32.mrb[0].mxu0
    %v242 = vadd.f32 0.0, %v241
    %v243 = vpop.f32.mrb[0].mxu0
    %v244 = vpop.f32.mrb[0].mxu0
    %v245 = vadd.f32 0.0, %v244
    %v246 = vpop.f32.mrb[0].mxu0
    %247 = vmatprep.mubr.bf16.mxu0 0
    %248 = vmatmul.mubr.bf16.gmra.mrb[0].mxu0 %v130
    %v249 = vpop.f32.mrb[0].mxu0
    %v250 = vadd.f32 0.0, %v249
    %v251 = vpop.f32.mrb[0].mxu0
    %v252 = vpop.f32.mrb[0].mxu0
    %v253 = vadd.f32 0.0, %v252
    %v254 = vpop.f32.mrb[0].mxu0
    %255 = vmatprep.mubr.bf16.mxu0 0
    %256 = vmatmul.mubr.bf16.gmra.mrb[0].mxu0 %v131
    %v257 = vpop.f32.mrb[0].mxu0
    %v258 = vadd.f32 0.0, %v257
    %v259 = vpop.f32.mrb[0].mxu0
    %v260 = vpop.f32.mrb[0].mxu0
    %v261 = vadd.f32 0.0, %v260
    %v262 = vpop.f32.mrb[0].mxu0
    %263 = vmatprep.mubr.bf16.mxu0 0
    %264 = vmatmul.mubr.bf16.gmra.mrb[0].mxu0 %v132
    %v265 = vpop.f32.mrb[0].mxu0
    %v266 = vadd.f32 0.0, %v265
    %v267 = vpop.f32.mrb[0].mxu0
    %v268 = vpop.f32.mrb[0].mxu0
    %v269 = vadd.f32 0.0, %v268
    %v270 = vpop.f32.mrb[0].mxu0
    %271 = vmatprep.mubr.bf16.mxu0 0
    %272 = vmatmul.mubr.bf16.gmra.mrb[0].mxu0 %v133
    %v273 = vpop.f32.mrb[0].mxu0
    %v274 = vadd.f32 0.0, %v273
    %v275 = vpop.f32.mrb[0].mxu0
    %v276 = vpop.f32.mrb[0].mxu0
    %v277 = vadd.f32 0.0, %v276
    %v278 = vpop.f32.mrb[0].mxu0
    %279 = vmatprep.mubr.bf16.mxu0 0
    %280 = vmatmul.mubr.bf16.gmra.mrb[0].mxu0 %v134
    %v281 = vpop.f32.mrb[0].mxu0
    %v282 = vadd.f32 0.0, %v281
    %v283 = vpop.f32.mrb[0].mxu0
    %v284 = vpop.f32.mrb[0].mxu0
    %v285 = vadd.f32 0.0, %v284
    %v286 = vpop.f32.mrb[0].mxu0
    %287 = vdwg.mxu0
    %v288 = vpack.c.bf16 %v229, %v226
    %v289 = vpack.c.bf16 %v237, %v234
    %v290 = vpack.c.bf16 %v245, %v242
    %v291 = vpack.c.bf16 %v253, %v250
    %v292 = vpack.c.bf16 %v261, %v258
    %v293 = vpack.c.bf16 %v269, %v266
    %v294 = vpack.c.bf16 %v277, %v274
    %v295 = vpack.c.bf16 %v285, %v282
    %v304 = vunpack.c.l.b16 %v288
    %v305 = vunpack.c.h.b16 %v288
    %v306 = vunpack.c.l.b16 %v289
    %v307 = vunpack.c.h.b16 %v289
    %v308 = vunpack.c.l.b16 %v290
    %v309 = vunpack.c.h.b16 %v290
    %v310 = vunpack.c.l.b16 %v291
    %v311 = vunpack.c.h.b16 %v291
    %v312 = vunpack.c.l.b16 %v292
    %v313 = vunpack.c.h.b16 %v292
    %v314 = vunpack.c.l.b16 %v293
    %v315 = vunpack.c.h.b16 %v293
    %v316 = vunpack.c.l.b16 %v294
    %v317 = vunpack.c.h.b16 %v294
    %v318 = vunpack.c.l.b16 %v295
    %v319 = vunpack.c.h.b16 %v295
    %v320 = vpack.c.b16 %v304, %v304
    %v321 = vpack.c.b16 %v305, %v305
    %v322 = vpack.c.b16 %v306, %v306
    %v323 = vpack.c.b16 %v307, %v307
    %v324 = vpack.c.b16 %v308, %v308
    %v325 = vpack.c.b16 %v309, %v309
    %v326 = vpack.c.b16 %v310, %v310
    %v327 = vpack.c.b16 %v311, %v311
    %v328 = vpack.c.b16 %v312, %v312
    %v329 = vpack.c.b16 %v313, %v313
    %v330 = vpack.c.b16 %v314, %v314
    %v331 = vpack.c.b16 %v315, %v315
    %v332 = vpack.c.b16 %v316, %v316
    %v333 = vpack.c.b16 %v317, %v317
    %v334 = vpack.c.b16 %v318, %v318
    %v335 = vpack.c.b16 %v319, %v319
    %352 = vst [vmem:[#allocation8] sm:$0xf] %v320
    %353 = vst [vmem:[#allocation8 + $0x4] sm:$0xf] %v321
    %354 = vst [vmem:[#allocation8 + $0x8] sm:$0xf] %v322
    %355 = vst [vmem:[#allocation8 + $0xc] sm:$0xf] %v323
    %356 = vst [vmem:[#allocation8 + $0x10] sm:$0xf] %v324
    %357 = vst [vmem:[#allocation8 + $0x14] sm:$0xf] %v325
    %358 = vst [vmem:[#allocation8 + $0x18] sm:$0xf] %v326
    %359 = vst [vmem:[#allocation8 + $0x1c] sm:$0xf] %v327
    %360 = vst [vmem:[#allocation8 + $0x20] sm:$0xf] %v328
    %361 = vst [vmem:[#allocation8 + $0x24] sm:$0xf] %v329
    %362 = vst [vmem:[#allocation8 + $0x28] sm:$0xf] %v330
    %363 = vst [vmem:[#allocation8 + $0x2c] sm:$0xf] %v331
    %364 = vst [vmem:[#allocation8 + $0x30] sm:$0xf] %v332
    %365 = vst [vmem:[#allocation8 + $0x34] sm:$0xf] %v333
    %366 = vst [vmem:[#allocation8 + $0x38] sm:$0xf] %v334
    %367 = vst [vmem:[#allocation8 + $0x3c] sm:$0xf] %v335
    %v368 = vld [vmem:[#allocation7] sm:$0xf]
    %v369 = vld [vmem:[#allocation7 + $0x4] sm:$0xf]
    %v370 = vld [vmem:[#allocation7 + $0x8] sm:$0xf]
    %v371 = vld [vmem:[#allocation7 + $0xc] sm:$0xf]
    %v372 = vld [vmem:[#allocation7 + $0x10] sm:$0xf]
    %v373 = vld [vmem:[#allocation7 + $0x14] sm:$0xf]
    %v374 = vld [vmem:[#allocation7 + $0x18] sm:$0xf]
    %v375 = vld [vmem:[#allocation7 + $0x1c] sm:$0xf]
    %v376 = vld [vmem:[#allocation7 + $0x20] sm:$0xf]
    %v377 = vld [vmem:[#allocation7 + $0x24] sm:$0xf]
    %v378 = vld [vmem:[#allocation7 + $0x28] sm:$0xf]
    %v379 = vld [vmem:[#allocation7 + $0x2c] sm:$0xf]
    %v380 = vld [vmem:[#allocation7 + $0x30] sm:$0xf]
    %v381 = vld [vmem:[#allocation7 + $0x34] sm:$0xf]
    %v382 = vld [vmem:[#allocation7 + $0x38] sm:$0xf]
    %v383 = vld [vmem:[#allocation7 + $0x3c] sm:$0xf]
    %v384 = vld [vmem:[%s3] sm:$0x1]
    %v386 = vlaneseq
    %v387 = vshrl.u32 %v386, 7
    %v388 = vsub.s32 0, %v387
    %v389 = vrot.slane %v384, %v388
    %v407 = vunpack.c.l.b16 %v368
    %v408 = vunpack.c.l.b16 %v369
    %v409 = vunpack.c.l.b16 %v370
    %v410 = vunpack.c.l.b16 %v371
    %v411 = vunpack.c.l.b16 %v372
    %v412 = vunpack.c.l.b16 %v373
    %v413 = vunpack.c.l.b16 %v374
    %v414 = vunpack.c.l.b16 %v375
    %v415 = vunpack.c.l.b16 %v376
    %v416 = vunpack.c.l.b16 %v377
    %v417 = vunpack.c.l.b16 %v378
    %v418 = vunpack.c.l.b16 %v379
    %v419 = vunpack.c.l.b16 %v380
    %v420 = vunpack.c.l.b16 %v381
    %v421 = vunpack.c.l.b16 %v382
    %v422 = vunpack.c.l.b16 %v383
    %v423 = vpack.c.b16 %v408, %v407
    %v424 = vpack.c.b16 %v410, %v409
    %v425 = vpack.c.b16 %v412, %v411
    %v426 = vpack.c.b16 %v414, %v413
    %v427 = vpack.c.b16 %v416, %v415
    %v428 = vpack.c.b16 %v418, %v417
    %v429 = vpack.c.b16 %v420, %v419
    %v430 = vpack.c.b16 %v422, %v421
    %439 = vmatprep.subr.bf16.mxu0 0
    %440 = vmatpush1.bf16.msra.mxu0 %v423
    %441 = vmatprep.subr.bf16.mxu0 0
    %442 = vmatpush1.bf16.msra.mxu0 %v424
    %443 = vmatprep.subr.bf16.mxu0 0
    %444 = vmatpush1.bf16.msra.mxu0 %v425
    %445 = vmatprep.subr.bf16.mxu0 0
    %446 = vmatpush1.bf16.msra.mxu0 %v426
    %447 = vmatprep.subr.bf16.mxu0 0
    %448 = vmatpush1.bf16.msra.mxu0 %v427
    %449 = vmatprep.subr.bf16.mxu0 0
    %450 = vmatpush1.bf16.msra.mxu0 %v428
    %451 = vmatprep.subr.bf16.mxu0 0
    %452 = vmatpush1.bf16.msra.mxu0 %v429
    %453 = vmatprep.subr.bf16.mxu0 0
    %454 = vmatpush1.bf16.msra.mxu0 %v430
    %455 = vmatprep.subr.bf16.mxu0 0
    %456 = vmatpush1.bf16.msra.mxu0 0
    %457 = vmatprep.subr.bf16.mxu0 0
    %458 = vmatpush1.bf16.msra.mxu0 0
    %459 = vmatprep.subr.bf16.mxu0 0
    %460 = vmatpush1.bf16.msra.mxu0 0
    %461 = vmatprep.subr.bf16.mxu0 0
    %462 = vmatpush1.bf16.msra.mxu0 0
    %463 = vmatprep.subr.bf16.mxu0 0
    %464 = vmatpush1.bf16.msra.mxu0 0
    %465 = vmatprep.subr.bf16.mxu0 0
    %466 = vmatpush1.bf16.msra.mxu0 0
    %467 = vmatprep.subr.bf16.mxu0 0
    %468 = vmatpush1.bf16.msra.mxu0 0
    %469 = vmatprep.subr.bf16.mxu0 0
    %470 = vmatpush1.bf16.msra.mxu0 0
    %471 = vmatprep.mubr.bf16.mxu0 0
    %472 = vmatmul.mubr.bf16.gmra.mrb[0].mxu0 %v127
    %v473 = vpop.f32.mrb[0].mxu0
    %v474 = vadd.f32 %v389, %v473
    %v475 = vpop.f32.mrb[0].mxu0
    %v476 = vpop.f32.mrb[0].mxu0
    %v477 = vadd.f32 %v389, %v476
    %v478 = vpop.f32.mrb[0].mxu0
    %479 = vmatprep.mubr.bf16.mxu0 0
    %480 = vmatmul.mubr.bf16.gmra.mrb[0].mxu0 %v128
    %v481 = vpop.f32.mrb[0].mxu0
    %v482 = vadd.f32 %v389, %v481
    %v483 = vpop.f32.mrb[0].mxu0
    %v484 = vpop.f32.mrb[0].mxu0
    %v485 = vadd.f32 %v389, %v484
    %v486 = vpop.f32.mrb[0].mxu0
    %487 = vmatprep.mubr.bf16.mxu0 0
    %488 = vmatmul.mubr.bf16.gmra.mrb[0].mxu0 %v129
    %v489 = vpop.f32.mrb[0].mxu0
    %v490 = vadd.f32 %v389, %v489
    %v491 = vpop.f32.mrb[0].mxu0
    %v492 = vpop.f32.mrb[0].mxu0
    %v493 = vadd.f32 %v389, %v492
    %v494 = vpop.f32.mrb[0].mxu0
    %495 = vmatprep.mubr.bf16.mxu0 0
    %496 = vmatmul.mubr.bf16.gmra.mrb[0].mxu0 %v130
    %v497 = vpop.f32.mrb[0].mxu0
    %v498 = vadd.f32 %v389, %v497
    %v499 = vpop.f32.mrb[0].mxu0
    %v500 = vpop.f32.mrb[0].mxu0
    %v501 = vadd.f32 %v389, %v500
    %v502 = vpop.f32.mrb[0].mxu0
    %503 = vmatprep.mubr.bf16.mxu0 0
    %504 = vmatmul.mubr.bf16.gmra.mrb[0].mxu0 %v131
    %v505 = vpop.f32.mrb[0].mxu0
    %v506 = vadd.f32 %v389, %v505
    %v507 = vpop.f32.mrb[0].mxu0
    %v508 = vpop.f32.mrb[0].mxu0
    %v509 = vadd.f32 %v389, %v508
    %v510 = vpop.f32.mrb[0].mxu0
    %511 = vmatprep.mubr.bf16.mxu0 0
    %512 = vmatmul.mubr.bf16.gmra.mrb[0].mxu0 %v132
    %v513 = vpop.f32.mrb[0].mxu0
    %v514 = vadd.f32 %v389, %v513
    %v515 = vpop.f32.mrb[0].mxu0
    %v516 = vpop.f32.mrb[0].mxu0
    %v517 = vadd.f32 %v389, %v516
    %v518 = vpop.f32.mrb[0].mxu0
    %519 = vmatprep.mubr.bf16.mxu0 0
    %520 = vmatmul.mubr.bf16.gmra.mrb[0].mxu0 %v133
    %v521 = vpop.f32.mrb[0].mxu0
    %v522 = vadd.f32 %v389, %v521
    %v523 = vpop.f32.mrb[0].mxu0
    %v524 = vpop.f32.mrb[0].mxu0
    %v525 = vadd.f32 %v389, %v524
    %v526 = vpop.f32.mrb[0].mxu0
    %527 = vmatprep.mubr.bf16.mxu0 0
    %528 = vmatmul.mubr.bf16.gmra.mrb[0].mxu0 %v134
    %v529 = vpop.f32.mrb[0].mxu0
    %v530 = vadd.f32 %v389, %v529
    %v531 = vpop.f32.mrb[0].mxu0
    %v532 = vpop.f32.mrb[0].mxu0
    %v533 = vadd.f32 %v389, %v532
    %v534 = vpop.f32.mrb[0].mxu0
    %535 = vdwg.mxu0
    %536 = vst [vmem:[#allocation9] sm:$0xff] %v474
    %537 = vst [vmem:[#allocation9 + $0x8] sm:$0xff] %v477
    %538 = vst [vmem:[#allocation9 + $0x10] sm:$0xff] %v482
    %539 = vst [vmem:[#allocation9 + $0x18] sm:$0xff] %v485
    %540 = vst [vmem:[#allocation9 + $0x20] sm:$0xff] %v490
    %541 = vst [vmem:[#allocation9 + $0x28] sm:$0xff] %v493
    %542 = vst [vmem:[#allocation9 + $0x30] sm:$0xff] %v498
    %543 = vst [vmem:[#allocation9 + $0x38] sm:$0xff] %v501
    %544 = vst [vmem:[#allocation9 + $0x40] sm:$0xff] %v506
    %545 = vst [vmem:[#allocation9 + $0x48] sm:$0xff] %v509
    %546 = vst [vmem:[#allocation9 + $0x50] sm:$0xff] %v514
    %547 = vst [vmem:[#allocation9 + $0x58] sm:$0xff] %v517
    %548 = vst [vmem:[#allocation9 + $0x60] sm:$0xff] %v522
    %549 = vst [vmem:[#allocation9 + $0x68] sm:$0xff] %v525
    %550 = vst [vmem:[#allocation9 + $0x70] sm:$0xff] %v530
    %551 = vst [vmem:[#allocation9 + $0x78] sm:$0xff] %v533
    // Predicated region
    $region30: #{tpu_custom_call.1} parent=1 // pred_check
      _
    $region31: #{tpu_custom_call.1} parent=1 // pred_check_branch
      %553 = sbr.rel (0) target = $region33
    $region32: #{tpu_custom_call.1} parent=1 // pred_region
      %s555 = ssub.s32 1024, 1024
      %556 = vsyncadd [#allocation4], %s555
      %s557 = sshll.u32 [#allocation8], 4
      %s558 = int_to_ptr.vmem [resolvable:$true] %s557
      %563 = dma.vmem_to_hbm [thread:$0]  %s558, 1024, %s4, [#allocation4], 64, 64, 4
    $region33: #{tpu_custom_call.1} parent=1 // pred_fallthru
      _
    // Predicated region
    $region34: #{tpu_custom_call.1} parent=1 // pred_check
      _
    $region35: #{tpu_custom_call.1} parent=1 // pred_check_branch
      %565 = sbr.rel (0) target = $region37
    $region36: #{tpu_custom_call.1} parent=1 // pred_region
      %s567 = ssub.s32 2048, 2048
      %568 = vsyncadd [#allocation10], %s567
      %s569 = sshll.u32 [#allocation9], 4
      %s570 = int_to_ptr.vmem [resolvable:$true] %s569
      %575 = dma.vmem_to_hbm [thread:$0]  %s570, 2048, %s5, [#allocation10], 128, 128, 8
    $region37: #{tpu_custom_call.1} parent=1 // pred_fallthru
      _
    // Predicated region
    $region38: #{tpu_custom_call.1} parent=1 // pred_check
      _
    $region39: #{tpu_custom_call.1} parent=1 // pred_check_branch
      %577 = sbr.rel (0) target = $region41
    $region40: #{tpu_custom_call.1} parent=1 // pred_region
      %578 = dma.done [#allocation4], 1024
    $region41: #{tpu_custom_call.1} parent=1 // pred_fallthru
      _
    // Predicated region
    $region42: #{tpu_custom_call.1} parent=1 // pred_check
      _
    $region43: #{tpu_custom_call.1} parent=1 // pred_check_branch
      %580 = sbr.rel (0) target = $region45
    $region44: #{tpu_custom_call.1} parent=1 // pred_region
      %581 = dma.done [#allocation10], 2048
    $region45: #{tpu_custom_call.1} parent=1 // pred_fallthru
      _
    %582 = vsyncpa [#allocation3], 1
    %583 = vsyncpa [#allocation6], 1
    %584 = vsyncpa [#allocation4], 1
    %585 = vsyncpa [#allocation10], 1

</llo_original>
